<compile_context>
chip_gen: v5e
topology: v5e:2x2
jax: 0.10.0
libtpu: 0.0.40
codegen_flags: <defaults>
</compile_context>

<pallas_src>
import jax
import jax.numpy as jnp
from jax.experimental import pallas as pl
from jax.experimental.pallas import tpu as pltpu

_LANE = 128                    # lanes per vreg
_ROW_ALIGN = 32                # row granularity: covers f32/bf16/int8 sublane packing
_ACC_ROWS = 32                 # resident accumulator rows per grid split
_TARGET_BLOCK_BYTES = 4 << 20  # ~4 MiB per input per pipeline buffer
_NUM_SPLITS = 2                # leading "parallel" grid axis (2 TensorCores on v7x)


def _streamed_abs_sum(pred2, true2):
    """Sum of |pred2 - true2| (cast to f32 on-chip) over a (rows, 128) pair."""
    rows = pred2.shape[0]

    itemsize = max(pred2.dtype.itemsize, true2.dtype.itemsize)
    target_rows = max(
        _ROW_ALIGN,
        (_TARGET_BLOCK_BYTES // (_LANE * itemsize)) // _ROW_ALIGN * _ROW_ALIGN)
    # Full-extent block when the whole input fits in one step (always legal);
    # otherwise a 32-row-aligned tile (satisfies the (8, 128) constraint).
    block_rows = rows if rows <= target_rows else target_rows
    n_blocks = pl.cdiv(rows, block_rows)
    num_splits = _NUM_SPLITS if n_blocks >= _NUM_SPLITS else 1
    blocks_per_split = pl.cdiv(n_blocks, num_splits)

    def data_map(c, i):
        # Clamp out-of-range steps onto the last valid block so the auto-DMA
        # stays in bounds; their contribution is zeroed by the masked path.
        return (jnp.minimum(c * blocks_per_split + i, n_blocks - 1), 0)

    def kernel(pred_ref, true_ref, out_ref):
        c = pl.program_id(0)
        i = pl.program_id(1)

        @pl.when(i == 0)
        def _():
            out_ref[...] = jnp.zeros_like(out_ref)

        # Logical (unclamped) first row covered by this step.
        row0 = (c * blocks_per_split + i) * block_rows
        is_full = row0 + block_rows <= rows       # fully in-range block?

        def abs_diff():
            return jnp.abs(pred_ref[...].astype(jnp.float32)
                           - true_ref[...].astype(jnp.float32))

        def accumulate(diff):
            # Fold the block onto the resident (32, 128) f32 slab: pure VPU adds
            # with several independent chains. The single cross-lane reduce
            # happens once, in the wrapper.
            r = diff.shape[0]
            r_main = (r // _ACC_ROWS) * _ACC_ROWS
            if r_main:
                out_ref[...] += diff[:r_main].reshape(
                    r_main // _ACC_ROWS, _ACC_ROWS, _LANE).sum(axis=0)
            rem = r - r_main
            if rem:
                out_ref[0:rem, :] += diff[r_main:, :]

        @pl.when(is_full)
        def _():
            # Hot path: no iota / compare / select work at all.
            accumulate(abs_diff())

        @pl.when(jnp.logical_not(is_full))
        def _():
            # Partial last block or a clamped duplicate step: mask rows >= rows.
            row_ids = row0 + jax.lax.broadcasted_iota(
                jnp.int32, (block_rows, _LANE), 0)
            accumulate(jnp.where(row_ids < rows, abs_diff(), 0.0))

    block_bytes = block_rows * _LANE * (pred2.dtype.itemsize + true2.dtype.itemsize)
    # Double-buffered input tiles + output slabs + headroom; stays within every
    # chip's physical VMEM while sitting comfortably above v5e's 16 MiB default.
    vmem_limit = int(min(max(2 * block_bytes + (4 << 20), 16 << 20), 32 << 20))
    bytes_accessed = (rows * _LANE
                      * (pred2.dtype.itemsize + true2.dtype.itemsize)
                      + num_splits * _ACC_ROWS * _LANE * 4)

    partials = pl.pallas_call(
        kernel,
        out_shape=jax.ShapeDtypeStruct((num_splits * _ACC_ROWS, _LANE), jnp.float32),
        grid=(num_splits, blocks_per_split),
        in_specs=[
            pl.BlockSpec((block_rows, _LANE), data_map),
            pl.BlockSpec((block_rows, _LANE), data_map),
        ],
        out_specs=pl.BlockSpec((_ACC_ROWS, _LANE), lambda c, i: (c, 0)),
        compiler_params=pltpu.CompilerParams(
            # TODO(synk): verify in xprof that the leading axis actually lands on
            # both v7x TensorCores; if not, switch to CORE_PARALLEL / pl.core_map.
            dimension_semantics=("parallel", "arbitrary"),
            vmem_limit_bytes=vmem_limit,
        ),
        cost_estimate=pl.CostEstimate(
            flops=3 * rows * _LANE, transcendentals=0,
            bytes_accessed=bytes_accessed),
    )(pred2, true2)

    return jnp.sum(partials)


@jax.jit
def mae(y_pred, y_true):
    """Pallas MAE: mean(|y_pred - y_true|) over all elements. Returns f32 scalar."""
    pred = jnp.ravel(y_pred)       # keep native dtype; cast happens inside the kernel
    true = jnp.ravel(y_true)
    n = pred.shape[0]
    assert true.shape[0] == n, "y_pred and y_true must have the same element count"

    rows = n // _LANE              # full 128-lane rows handled by the kernel
    n_main = rows * _LANE
    total = jnp.float32(0.0)

    if rows > 0:
        if n_main != n:
            pred_main, true_main = pred[:n_main], true[:n_main]
        else:                      # common case: zero-copy reshape, no slice/pad
            pred_main, true_main = pred, true
        total = total + _streamed_abs_sum(pred_main.reshape(rows, _LANE),
                                          true_main.reshape(rows, _LANE))

    if n_main != n:                # <=127-element ragged tail, done in the wrapper
        pt = pred[n_main:].astype(jnp.float32)
        tt = true[n_main:].astype(jnp.float32)
        total = total + jnp.sum(jnp.abs(pt - tt))

    return total / jnp.float32(n)


if __name__ == "__main__":
    key = jax.random.PRNGKey(0)
    k1, k2, k3, k4, k5, k6 = jax.random.split(key, 6)

    # Small shapes consistent with the module (it accepts any shapes and flattens).
    y_pred = jax.random.normal(k1, (2, 4, 16, 16), dtype=jnp.float32)
    # y_true arrives non-float in the reference (cast via .type(torch.FloatTensor));
    # emulate with an int input — the cast happens inside the kernel.
    y_true = jax.random.randint(k2, (2, 4, 16, 16), minval=-3, maxval=4).astype(jnp.int32)

    result = mae(y_pred, y_true)
    jax.block_until_ready(result)
    ref = jnp.mean(jnp.abs(jnp.ravel(y_pred) - jnp.ravel(y_true).astype(jnp.float32)))
    assert jnp.allclose(result, ref, rtol=1e-6, atol=1e-6), (result, ref)

    # Ragged element count (n % 128 != 0): kernel handles the 128-aligned prefix,
    # wrapper adds the <=127-element tail.
    yp2 = jax.random.normal(k3, (5, 70001), dtype=jnp.float32)
    yt2 = jax.random.randint(k4, (5, 70001), minval=-3, maxval=4).astype(jnp.int32)
    r2 = mae(yp2, yt2)
    jax.block_until_ready(r2)
    ref2 = jnp.mean(jnp.abs(jnp.ravel(yp2) - jnp.ravel(yt2).astype(jnp.float32)))
    assert jnp.allclose(r2, ref2, rtol=1e-5, atol=1e-6), (r2, ref2)

    # Multi-block + two-split + mixed-dtype path: exercises the unmasked fast
    # path and the clamped duplicate step on the second grid split.
    yp3 = jax.random.normal(k5, (3, 1024, 1024), dtype=jnp.float32)
    yt3 = jax.random.normal(k6, (3, 1024, 1024), dtype=jnp.bfloat16)
    r3 = mae(yp3, yt3)
    jax.block_until_ready(r3)
    ref3 = jnp.mean(jnp.abs(jnp.ravel(yp3) - jnp.ravel(yt3).astype(jnp.float32)))
    assert jnp.allclose(r3, ref3, rtol=1e-4, atol=1e-6), (r3, ref3)

    print("KERNEL_OK")
</pallas_src>

<mosaic_0001>
module attributes {stable_mosaic.version = 11 : i64} {
  func.func @kernel(%arg0: i32, %arg1: i32, %arg2: memref<16x128xf32, #tpu.memory_space<vmem>>, %arg3: memref<16x128xi32, #tpu.memory_space<vmem>>, %arg4: memref<32x128xf32, #tpu.memory_space<vmem>>) attributes {dimension_semantics = [#tpu.dimension_semantics<parallel>, #tpu.dimension_semantics<arbitrary>], iteration_bounds = array<i64: 1, 1>, scalar_prefetch = 0 : i64, scratch_operands = 0 : i64, tpu.core_type = #tpu.core_type<tc>, window_params = [{transform_indices = @transform_0, window_bounds = array<i64: 16, 128>}, {transform_indices = @transform_1, window_bounds = array<i64: 16, 128>}, {transform_indices = @transform_2, window_bounds = array<i64: 32, 128>}]} {
    %c0_i32 = arith.constant 0 : i32
    %0 = arith.cmpi eq, %arg1, %c0_i32 : i32
    %1 = arith.extui %0 : i1 to i32
    %c0_i32_0 = arith.constant 0 : i32
    %2 = arith.cmpi ne, %1, %c0_i32_0 : i32
    scf.if %2 {
      %cst = arith.constant 0.000000e+00 : f32
      %13 = vector.broadcast %cst : f32 to vector<32x128xf32>
      %c0 = arith.constant 0 : index
      %c0_5 = arith.constant 0 : index
      %14 = vector.load %arg4[%c0, %c0_5] : memref<32x128xf32, #tpu.memory_space<vmem>>, vector<32x128xf32>
      tpu.vector_store %arg4[%c0, %c0_5], %13 {strides = array<i32>} : memref<32x128xf32, #tpu.memory_space<vmem>>, vector<32x128xf32>,
    } else {
    }
    %c1_i32 = arith.constant 1 : i32
    %3 = arith.muli %arg0, %c1_i32 : i32
    %4 = arith.addi %3, %arg1 : i32
    %c16_i32 = arith.constant 16 : i32
    %5 = arith.muli %4, %c16_i32 : i32
    %c16_i32_1 = arith.constant 16 : i32
    %6 = arith.addi %5, %c16_i32_1 : i32
    %c16_i32_2 = arith.constant 16 : i32
    %7 = arith.cmpi sle, %6, %c16_i32_2 : i32
    %8 = arith.extui %7 : i1 to i32
    %c0_i32_3 = arith.constant 0 : i32
    %9 = arith.cmpi ne, %8, %c0_i32_3 : i32
    scf.if %9 {
      %c0 = arith.constant 0 : index
      %c0_5 = arith.constant 0 : index
      %13 = vector.load %arg2[%c0, %c0_5] : memref<16x128xf32, #tpu.memory_space<vmem>>, vector<16x128xf32>
      %c0_6 = arith.constant 0 : index
      %c0_7 = arith.constant 0 : index
      %14 = vector.load %arg3[%c0_6, %c0_7] : memref<16x128xi32, #tpu.memory_space<vmem>>, vector<16x128xi32>
      %15 = arith.sitofp %14 : vector<16x128xi32> to vector<16x128xf32>
      %16 = arith.subf %13, %15 : vector<16x128xf32>
      %17 = math.absf %16 : vector<16x128xf32>
      %c0_8 = arith.constant 0 : index
      %c0_9 = arith.constant 0 : index
      %18 = vector.load %arg4[%c0_8, %c0_9] : memref<32x128xf32, #tpu.memory_space<vmem>>, vector<16x128xf32>
      %19 = arith.addf %18, %17 : vector<16x128xf32>
      %c0_10 = arith.constant 0 : index
      %c0_11 = arith.constant 0 : index
      %20 = vector.load %arg4[%c0_10, %c0_11] : memref<32x128xf32, #tpu.memory_space<vmem>>, vector<16x128xf32>
      tpu.vector_store %arg4[%c0_10, %c0_11], %19 {strides = array<i32>} : memref<32x128xf32, #tpu.memory_space<vmem>>, vector<16x128xf32>,
    } else {
    }
    %true = arith.constant true
    %10 = arith.xori %7, %true : i1
    %11 = arith.extui %10 : i1 to i32
    %c0_i32_4 = arith.constant 0 : i32
    %12 = arith.cmpi ne, %11, %c0_i32_4 : i32
    scf.if %12 {
      %13 = tpu.iota {dimensions = array<i32: 0>} : vector<16x128xi32>
      %14 = vector.broadcast %5 : i32 to vector<16x128xi32>
      %15 = arith.addi %14, %13 : vector<16x128xi32>
      %c16_i32_5 = arith.constant 16 : i32
      %16 = vector.broadcast %c16_i32_5 : i32 to vector<16x128xi32>
      %17 = arith.cmpi slt, %15, %16 : vector<16x128xi32>
      %c0 = arith.constant 0 : index
      %c0_6 = arith.constant 0 : index
      %18 = vector.load %arg2[%c0, %c0_6] : memref<16x128xf32, #tpu.memory_space<vmem>>, vector<16x128xf32>
      %c0_7 = arith.constant 0 : index
      %c0_8 = arith.constant 0 : index
      %19 = vector.load %arg3[%c0_7, %c0_8] : memref<16x128xi32, #tpu.memory_space<vmem>>, vector<16x128xi32>
      %20 = arith.sitofp %19 : vector<16x128xi32> to vector<16x128xf32>
      %21 = arith.subf %18, %20 : vector<16x128xf32>
      %22 = math.absf %21 : vector<16x128xf32>
      %cst = arith.constant 0.000000e+00 : f32
      %23 = vector.broadcast %cst : f32 to vector<16x128xf32>
      %24 = arith.select %17, %22, %23 : vector<16x128xi1>, vector<16x128xf32>
      %c0_9 = arith.constant 0 : index
      %c0_10 = arith.constant 0 : index
      %25 = vector.load %arg4[%c0_9, %c0_10] : memref<32x128xf32, #tpu.memory_space<vmem>>, vector<16x128xf32>
      %26 = arith.addf %25, %24 : vector<16x128xf32>
      %c0_11 = arith.constant 0 : index
      %c0_12 = arith.constant 0 : index
      %27 = vector.load %arg4[%c0_11, %c0_12] : memref<32x128xf32, #tpu.memory_space<vmem>>, vector<16x128xf32>
      tpu.vector_store %arg4[%c0_11, %c0_12], %26 {strides = array<i32>} : memref<32x128xf32, #tpu.memory_space<vmem>>, vector<16x128xf32>,
    } else {
    }
    return
  }
  func.func @transform_0(%arg0: i32, %arg1: i32) -> (i32, i32) {
    %c1_i32 = arith.constant 1 : i32
    %0 = arith.muli %arg0, %c1_i32 : i32
    %1 = arith.addi %0, %arg1 : i32
    %c0_i32 = arith.constant 0 : i32
    %2 = arith.minsi %1, %c0_i32 : i32
    %c0_i32_0 = arith.constant 0 : i32
    %c0_i32_1 = arith.constant 0 : i32
    return %2, %c0_i32_0 : i32, i32
  }
  func.func @transform_1(%arg0: i32, %arg1: i32) -> (i32, i32) {
    %c1_i32 = arith.constant 1 : i32
    %0 = arith.muli %arg0, %c1_i32 : i32
    %1 = arith.addi %0, %arg1 : i32
    %c0_i32 = arith.constant 0 : i32
    %2 = arith.minsi %1, %c0_i32 : i32
    %c0_i32_0 = arith.constant 0 : i32
    %c0_i32_1 = arith.constant 0 : i32
    return %2, %c0_i32_0 : i32, i32
  }
  func.func @transform_2(%arg0: i32, %arg1: i32) -> (i32, i32) {
    %c0_i32 = arith.constant 0 : i32
    %c0_i32_0 = arith.constant 0 : i32
    return %arg0, %c0_i32 : i32, i32
  }
}

</mosaic_0001>

<llo_original>
// kernel: mae.1
$region0: #{mae.1}
  #allocation0 [shape = 'u32[]', space=smem, size = 0x4, offset = 0x4, fixed_abs, tag = 'smem constant byte address 0x4 - core index']
  #allocation1 [shape = 'u32[72,128]{1,0:T(1,128)}', space=vmem, size = 0x9000, scoped, tag = 'internal scratch']
  %s0 = inlined_call_operand.vmem [shape: f32[16,128], index: 0, kind: input, shape index: {}]
  %s1 = inlined_call_operand.vmem [shape: s32[16,128], index: 1, kind: input, shape index: {}]
  %s2 = inlined_call_operand.vmem [shape: f32[32,128], index: 2, kind: output, shape index: {}]
  %s3 = sld [smem:[#allocation0]]
  $region30: #{mae.1} parent=0
    _
  %s5 = ssub.s32 1, %s3
  %s6 = scalar_select 0, %s5, %s3
  // Predicated region
  $region2: #{mae.1} parent=0 // pred_check
    _
  $region3: #{mae.1} parent=0 // pred_check_branch
    %8 = sbr.rel (0) target = $region5
  $region4: #{mae.1} parent=0 // pred_region
    %s9 = sadd.s32 0, 0
    %p10 = scmp.lt.s32.totalorder %s9, 0
    %s11 = scalar_select %p10, %s9, 0
    %s12 = smul.u32 2, %s11
    %p13 = scmp.lt.s32.totalorder %s12, 1
    %s14 = scalar_select %p13, %s12, 1
    %s15 = smul.addr %s14, 8
    %s16 = scalar_lea.vmem %s0, %s15
    %s17 = sadd.s32 0, 0
    %p18 = scmp.lt.s32.totalorder %s17, 0
    %s19 = scalar_select %p18, %s17, 0
    %s20 = smul.u32 2, %s19
  $region5: #{mae.1} parent=0 // pred_fallthru
    _
  // Predicated region
  $region6: #{mae.1} parent=0 // pred_check
    _
  $region7: #{mae.1} parent=0 // pred_check_branch
    %22 = sbr.rel (0) target = $region9
  $region8: #{mae.1} parent=0 // pred_region
    %s23 = sadd.s32 0, 0
    %p24 = scmp.lt.s32.totalorder %s23, 0
    %s25 = scalar_select %p24, %s23, 0
    %s26 = smul.u32 2, %s25
    %p27 = scmp.lt.s32.totalorder %s26, 1
    %s28 = scalar_select %p27, %s26, 1
    %s29 = smul.addr %s28, 8
    %s30 = scalar_lea.vmem %s1, %s29
    %s31 = sadd.s32 0, 0
    %p32 = scmp.lt.s32.totalorder %s31, 0
    %s33 = scalar_select %p32, %s31, 0
    %s34 = smul.u32 2, %s33
  $region9: #{mae.1} parent=0 // pred_fallthru
    _
  %s35 = sadd.s32 0, 0
  %p36 = scmp.lt.s32.totalorder %s35, 0
  %s37 = scalar_select %p36, %s35, 0
  %s38 = smul.u32 2, %s37
  %p39 = scmp.lt.s32.totalorder %s38, 1
  %s40 = scalar_select %p39, %s38, 1
  %s41 = smul.addr %s40, 8
  %s42 = scalar_lea.vmem %s0, %s41
  %s43 = sadd.s32 0, 0
  %p44 = scmp.lt.s32.totalorder %s43, 0
  %s45 = scalar_select %p44, %s43, 0
  %s46 = smul.u32 2, %s45
  %p47 = scmp.lt.s32.totalorder %s46, 1
  %s48 = scalar_select %p47, %s46, 1
  %s49 = smul.addr %s48, 8
  %s50 = scalar_lea.vmem %s1, %s49
  %s51 = sadd.s32 0, 0
  %p52 = scmp.lt.s32.totalorder %s51, 0
  %s53 = scalar_select %p52, %s51, 0
  %s54 = smul.u32 2, %s53
  %p55 = scmp.lt.s32.totalorder %s54, 1
  %s56 = scalar_select %p55, %s54, 1
  %s57 = smul.addr %s56, 8
  %s58 = scalar_lea.vmem %s0, %s57
  %s59 = sadd.s32 0, 0
  %p60 = scmp.lt.s32.totalorder %s59, 0
  %s61 = scalar_select %p60, %s59, 0
  %s62 = smul.u32 2, %s61
  %s63 = sadd.s32 0, 0
  %p64 = scmp.lt.s32.totalorder %s63, 0
  %s65 = scalar_select %p64, %s63, 0
  %s66 = smul.u32 2, %s65
  %p67 = scmp.lt.s32.totalorder %s66, 1
  %s68 = scalar_select %p67, %s66, 1
  %s69 = smul.addr %s68, 8
  %s70 = scalar_lea.vmem %s1, %s69
  %s71 = sadd.s32 0, 0
  %p72 = scmp.lt.s32.totalorder %s71, 0
  %s73 = scalar_select %p72, %s71, 0
  %s74 = smul.u32 2, %s73
  %p75 = scmp.eq.s32.totalorder 0, 0
  // Predicated region
  $region10: #{mae.1} parent=0 // pred_check
    %p76 = pneg %p75
  $region11: #{mae.1} parent=0 // pred_check_branch
    %78 = sbr.rel (%p76) target = $region13
  $region12: #{mae.1} parent=0 // pred_region
    %79 = vst [vmem:[%s2] sm:$0xff] 0.0
    %80 = vst [vmem:[%s2 + $0x8] sm:$0xff] 0.0
    %81 = vst [vmem:[%s2 + $0x10] sm:$0xff] 0.0
    %82 = vst [vmem:[%s2 + $0x18] sm:$0xff] 0.0
  $region13: #{mae.1} parent=0 // pred_fallthru
    _
  %s83 = sadd.s32 0, 0
  %s84 = smul.u32 %s83, 16
  %s85 = sadd.s32 %s84, 16
  %p86 = scmp.le.s32.totalorder %s85, 16
  // Predicated region
  $region14: #{mae.1} parent=0 // pred_check
    %p87 = pneg %p86
  $region15: #{mae.1} parent=0 // pred_check_branch
    %89 = sbr.rel (%p87) target = $region17
  $region16: #{mae.1} parent=0 // pred_region
    %v90 = vld [vmem:[%s58] sm:$0xff]
    %v91 = vld [vmem:[%s58 + $0x8] sm:$0xff]
    %v92 = vld [vmem:[%s70] sm:$0xff]
    %v93 = vld [vmem:[%s70 + $0x8] sm:$0xff]
    %v94 = vcvt.s32.f32 %v92
    %v95 = vcvt.s32.f32 %v93
    %v96 = vsub.f32 %v90, %v94
    %v97 = vsub.f32 %v91, %v95
    %v98 = vand.u32 2147483647, %v96
    %v99 = vand.u32 2147483647, %v97
    %v100 = vld [vmem:[%s2] sm:$0xff]
    %v101 = vld [vmem:[%s2 + $0x8] sm:$0xff]
    %v102 = vadd.f32 %v100, %v98
    %v103 = vadd.f32 %v101, %v99
    %104 = vst [vmem:[%s2] sm:$0xff] %v102
    %105 = vst [vmem:[%s2 + $0x8] sm:$0xff] %v103
  $region17: #{mae.1} parent=0 // pred_fallthru
    _
  %p106 = scmp.gt.s32.totalorder %s85, 16
  // Predicated region
  $region18: #{mae.1} parent=0 // pred_check
    %p107 = pneg %p106
  $region19: #{mae.1} parent=0 // pred_check_branch
    %109 = sbr.rel (%p107) target = $region21
  $region20: #{mae.1} parent=0 // pred_region
    %v110 = vlaneseq
    %v111 = vshrl.u32 %v110, 7
    %v112 = vadd.s32 %v111, 8
    %v113 = vstv %s84
    %v114 = vadd.s32 %v113, %v111
    %v115 = vadd.s32 %v113, %v112
    %vm116 = vcmp.lt.s32.totalorder %v114, 16
    %vm117 = vcmp.lt.s32.totalorder %v115, 16
    %v118 = vld [vmem:[%s58] sm:$0xff]
    %v119 = vld [vmem:[%s58 + $0x8] sm:$0xff]
    %v120 = vld [vmem:[%s70] sm:$0xff]
    %v121 = vld [vmem:[%s70 + $0x8] sm:$0xff]
    %v122 = vcvt.s32.f32 %v120
    %v123 = vcvt.s32.f32 %v121
    %v124 = vsub.f32 %v118, %v122
    %v125 = vsub.f32 %v119, %v123
    %v126 = vand.u32 2147483647, %v124
    %v127 = vand.u32 2147483647, %v125
    %v128 = vsel %vm116, %v126, 0.0
    %v129 = vsel %vm117, %v127, 0.0
    %v130 = vld [vmem:[%s2] sm:$0xff]
    %v131 = vld [vmem:[%s2 + $0x8] sm:$0xff]
    %v132 = vadd.f32 %v130, %v128
    %v133 = vadd.f32 %v131, %v129
    %134 = vst [vmem:[%s2] sm:$0xff] %v132
    %135 = vst [vmem:[%s2 + $0x8] sm:$0xff] %v133
  $region21: #{mae.1} parent=0 // pred_fallthru
    _
  // Predicated region
  $region22: #{mae.1} parent=0 // pred_check
    _
  $region23: #{mae.1} parent=0 // pred_check_branch
    %137 = sbr.rel (0) target = $region25
  $region24: #{mae.1} parent=0 // pred_region
    _
  $region25: #{mae.1} parent=0 // pred_fallthru
    _
  // Predicated region
  $region26: #{mae.1} parent=0 // pred_check
    _
  $region27: #{mae.1} parent=0 // pred_check_branch
    %139 = sbr.rel (0) target = $region29
  $region28: #{mae.1} parent=0 // pred_region
    _
  $region29: #{mae.1} parent=0 // pred_fallthru
    _

</llo_original>
